<compile_context>
chip_gen: v7x
topology: tpu7x:2x2x1
jax: 0.10.0
libtpu: 0.0.40
codegen_flags: <defaults>
</compile_context>

<pallas_src>
import jax
import jax.numpy as jnp
from jax.experimental import pallas as pl
from jax.experimental.pallas import tpu as pltpu

LN_EPS = 1e-5  # PyTorch nn.LayerNorm default eps


def _round_up(x, m):
    return (x + m - 1) // m * m


def ffn_kernel(x_ref, gamma_ref, beta_ref, w1_ref, b1_ref, w2_ref, b2_ref,
               o_ref, xn_ref, acc_ref):
    k = pl.program_id(1)

    # --- first hidden tile: LayerNorm + accumulator init (residual + bias2) ---
    @pl.when(k == 0)
    def _():
        x = x_ref[...].astype(jnp.float32)                       # [TM, D]
        mean = jnp.mean(x, axis=-1, keepdims=True)
        centered = x - mean
        var = jnp.mean(centered * centered, axis=-1, keepdims=True)
        xn = centered * jax.lax.rsqrt(var + LN_EPS)
        xn = xn * gamma_ref[...] + beta_ref[...]                  # gamma/beta: [1, D]
        xn_ref[...] = xn.astype(xn_ref.dtype)                     # cached (bf16) for MXU
        acc_ref[...] = x + b2_ref[...]                            # residual + bias2 (f32)

    # --- Linear1 slice + ReLU (dropout_1 = identity) ---
    h = jnp.dot(xn_ref[...], w1_ref[...],                         # [TM, tH] f32 acc
                preferred_element_type=jnp.float32)
    h = jnp.maximum(h + b1_ref[...], 0.0)

    # --- Linear2 slice accumulation (dropout_2 = identity) ---
    acc_ref[...] += jnp.dot(h.astype(w2_ref.dtype), w2_ref[...],  # [TM, D]
                            preferred_element_type=jnp.float32)

    # --- last hidden tile: write out ---
    @pl.when(k == pl.num_programs(1) - 1)
    def _():
        o_ref[...] = acc_ref[...].astype(o_ref.dtype)


def positionwise_feed_forward(x, gamma, beta, w1, b1, w2, b2, *,
                              row_tile=256, hidden_tile=512,
                              matmul_dtype=jnp.bfloat16):
    """x: [B, S, D] (or [N, D]); w1: [D, H]; w2: [H, D]; biases 2-D [1, *]."""
    orig_shape = x.shape
    D = orig_shape[-1]
    H = w1.shape[1]
    x2d = x.reshape(-1, D)
    N = x2d.shape[0]

    # --- row tiling: clamp tile to the (8-rounded) row count, pad partial tile ---
    tm = max(8, min(_round_up(row_tile, 8), _round_up(N, 8)))
    N_pad = _round_up(N, tm)
    if N_pad != N:
        x2d = jnp.pad(x2d, ((0, N_pad - N), (0, 0)))

    # --- hidden tiling: whole H resident if small, else 128-multiple tiles ---
    if H <= hidden_tile:
        th, H_pad = H, H
    else:
        th = _round_up(hidden_tile, 128)
        H_pad = _round_up(H, th)

    w1m = w1.astype(matmul_dtype)
    w2m = w2.astype(matmul_dtype)
    b1f = b1.astype(jnp.float32)
    if H_pad != H:  # zero-padding the hidden dim is exact (relu(0)=0, 0*w2=0)
        w1m = jnp.pad(w1m, ((0, 0), (0, H_pad - H)))
        b1f = jnp.pad(b1f, ((0, 0), (0, H_pad - H)))
        w2m = jnp.pad(w2m, ((0, H_pad - H), (0, 0)))

    grid = (N_pad // tm, H_pad // th)

    itemsize = jnp.dtype(matmul_dtype).itemsize
    cost = pl.CostEstimate(
        flops=4 * N_pad * D * H_pad,
        transcendentals=N_pad,
        bytes_accessed=(2 * N_pad * D * 4) + (D * H_pad + H_pad * D) * itemsize,
    )

    out = pl.pallas_call(
        ffn_kernel,
        out_shape=jax.ShapeDtypeStruct((N_pad, D), x.dtype),
        grid_spec=pltpu.PrefetchScalarGridSpec(
            num_scalar_prefetch=0,
            grid=grid,
            in_specs=[
                pl.BlockSpec((tm, D), lambda i, k: (i, 0)),   # x rows
                pl.BlockSpec((1, D), lambda i, k: (0, 0)),    # gamma
                pl.BlockSpec((1, D), lambda i, k: (0, 0)),    # beta
                pl.BlockSpec((D, th), lambda i, k: (0, k)),   # w1 slice
                pl.BlockSpec((1, th), lambda i, k: (0, k)),   # b1 slice
                pl.BlockSpec((th, D), lambda i, k: (k, 0)),   # w2 slice
                pl.BlockSpec((1, D), lambda i, k: (0, 0)),    # b2
            ],
            out_specs=pl.BlockSpec((tm, D), lambda i, k: (i, 0)),
            scratch_shapes=[
                pltpu.VMEM((tm, D), matmul_dtype),            # cached LayerNorm output
                pltpu.VMEM((tm, D), jnp.float32),             # output accumulator
            ],
        ),
        compiler_params=pltpu.CompilerParams(
            dimension_semantics=("parallel", "arbitrary"),
            vmem_limit_bytes=64 * 1024 * 1024,
        ),
        cost_estimate=cost,
    )(x2d,
      gamma.astype(jnp.float32), beta.astype(jnp.float32),
      w1m, b1f, w2m, b2.astype(jnp.float32))

    if N_pad != N:
        out = out[:N]
    return out.reshape(orig_shape)


def init_params(key, size, hidden_size, dtype=jnp.float32):
    """Deterministic init mirroring nn.Linear / nn.LayerNorm shapes."""
    k1, k2, k3, k4 = jax.random.split(key, 4)
    bound1 = 1.0 / (size ** 0.5)
    w1 = jax.random.uniform(k1, (size, hidden_size), dtype, -bound1, bound1)
    b1 = jax.random.uniform(k2, (1, hidden_size), dtype, -bound1, bound1)
    bound2 = 1.0 / (hidden_size ** 0.5)
    w2 = jax.random.uniform(k3, (hidden_size, size), dtype, -bound2, bound2)
    b2 = jax.random.uniform(k4, (1, size), dtype, -bound2, bound2)
    gamma = jnp.ones((1, size), dtype)
    beta = jnp.zeros((1, size), dtype)
    return gamma, beta, w1, b1, w2, b2


def reference(x, gamma, beta, w1, b1, w2, b2, matmul_dtype=jnp.float32):
    """Pure-JAX reference mirroring the kernel's cast pattern for the matmuls."""
    x32 = x.astype(jnp.float32)
    mean = jnp.mean(x32, axis=-1, keepdims=True)
    var = jnp.mean((x32 - mean) ** 2, axis=-1, keepdims=True)
    xn = (x32 - mean) * jax.lax.rsqrt(var + LN_EPS) * gamma + beta
    h = jnp.dot(xn.astype(matmul_dtype), w1.astype(matmul_dtype),
                preferred_element_type=jnp.float32) + b1
    h = jnp.maximum(h, 0.0)
    out = jnp.dot(h.astype(matmul_dtype), w2.astype(matmul_dtype),
                  preferred_element_type=jnp.float32) + b2
    return (out + x32).astype(x.dtype)


if __name__ == "__main__":
    key = jax.random.PRNGKey(0)
    kx, kp = jax.random.split(key)

    # small-but-lane-dense shapes; seq=9 exercises the row-padding path
    batch, seq, size, hidden = 2, 9, 128, 384
    x = jax.random.normal(kx, (batch, seq, size), jnp.float32)
    gamma, beta, w1, b1, w2, b2 = init_params(kp, size, hidden)

    # bf16-MXU path with the hidden axis tiled (exercises the reduction grid).
    out = positionwise_feed_forward(x, gamma, beta, w1, b1, w2, b2,
                                    hidden_tile=128)
    out = jax.block_until_ready(out)
    ref_bf16 = reference(x, gamma, beta, w1, b1, w2, b2,
                         matmul_dtype=jnp.bfloat16)
    assert out.shape == x.shape
    assert jnp.allclose(out, ref_bf16, atol=1e-2, rtol=1e-2), "bf16 path mismatch"

    # f32-MXU path (single hidden tile) vs f32 reference.
    out_f32 = positionwise_feed_forward(x, gamma, beta, w1, b1, w2, b2,
                                        matmul_dtype=jnp.float32)
    out_f32 = jax.block_until_ready(out_f32)
    ref_f32 = reference(x, gamma, beta, w1, b1, w2, b2,
                        matmul_dtype=jnp.float32)
    assert jnp.allclose(out_f32, ref_f32, atol=2e-3, rtol=2e-3), "f32 path mismatch"

    print("KERNEL_OK")
</pallas_src>

<mosaic_0001>
module attributes {stable_mosaic.version = 11 : i64} {
  func.func @ffn_kernel(%arg0: i32, %arg1: i32, %arg2: memref<24x128xf32, #tpu.memory_space<vmem>>, %arg3: memref<1x128xf32, #tpu.memory_space<vmem>>, %arg4: memref<1x128xf32, #tpu.memory_space<vmem>>, %arg5: memref<128x128xbf16, #tpu.memory_space<vmem>>, %arg6: memref<1x128xf32, #tpu.memory_space<vmem>>, %arg7: memref<128x128xbf16, #tpu.memory_space<vmem>>, %arg8: memref<1x128xf32, #tpu.memory_space<vmem>>, %arg9: memref<24x128xf32, #tpu.memory_space<vmem>>, %arg10: memref<24x128xbf16, #tpu.memory_space<vmem>>, %arg11: memref<24x128xf32, #tpu.memory_space<vmem>>) attributes {dimension_semantics = [#tpu.dimension_semantics<parallel>, #tpu.dimension_semantics<arbitrary>], iteration_bounds = array<i64: 1, 3>, scalar_prefetch = 0 : i64, scratch_operands = 2 : i64, tpu.core_type = #tpu.core_type<tc>, window_params = [{transform_indices = @transform_0, window_bounds = array<i64: 24, 128>}, {pipeline_mode = #tpu.pipeline_mode<synchronous>, transform_indices = @transform_1, window_bounds = array<i64: 1, 128>}, {pipeline_mode = #tpu.pipeline_mode<synchronous>, transform_indices = @transform_2, window_bounds = array<i64: 1, 128>}, {transform_indices = @transform_3, window_bounds = array<i64: 128, 128>}, {transform_indices = @transform_4, window_bounds = array<i64: 1, 128>}, {transform_indices = @transform_5, window_bounds = array<i64: 128, 128>}, {pipeline_mode = #tpu.pipeline_mode<synchronous>, transform_indices = @transform_6, window_bounds = array<i64: 1, 128>}, {transform_indices = @transform_7, window_bounds = array<i64: 24, 128>}]} {
    %c0_i32 = arith.constant 0 : i32
    %0 = arith.cmpi eq, %arg1, %c0_i32 : i32
    %1 = arith.extui %0 : i1 to i32
    %c0_i32_0 = arith.constant 0 : i32
    %2 = arith.cmpi ne, %1, %c0_i32_0 : i32
    scf.if %2 {
      %c0_15 = arith.constant 0 : index
      %c0_16 = arith.constant 0 : index
      %20 = vector.load %arg2[%c0_15, %c0_16] : memref<24x128xf32, #tpu.memory_space<vmem>>, vector<24x128xf32>
      %cst_17 = arith.constant dense<0.000000e+00> : vector<24xf32>
      %21 = vector.multi_reduction <add>, %20, %cst_17 [1] : vector<24x128xf32> to vector<24xf32>
      %22 = vector.shape_cast %21 : vector<24xf32> to vector<24x1xf32>
      %cst_18 = arith.constant 1.280000e+02 : f32
      %23 = vector.broadcast %cst_18 : f32 to vector<24x1xf32>
      %24 = arith.divf %22, %23 : vector<24x1xf32>
      %25 = vector.broadcast %24 : vector<24x1xf32> to vector<24x128xf32>
      %26 = arith.subf %20, %25 : vector<24x128xf32>
      %27 = arith.mulf %26, %26 : vector<24x128xf32>
      %cst_19 = arith.constant dense<0.000000e+00> : vector<24xf32>
      %28 = vector.multi_reduction <add>, %27, %cst_19 [1] : vector<24x128xf32> to vector<24xf32>
      %29 = vector.shape_cast %28 : vector<24xf32> to vector<24x1xf32>
      %cst_20 = arith.constant 1.280000e+02 : f32
      %30 = vector.broadcast %cst_20 : f32 to vector<24x1xf32>
      %31 = arith.divf %29, %30 : vector<24x1xf32>
      %cst_21 = arith.constant 9.99999974E-6 : f32
      %32 = vector.broadcast %cst_21 : f32 to vector<24x1xf32>
      %33 = arith.addf %31, %32 : vector<24x1xf32>
      %34 = math.rsqrt %33 : vector<24x1xf32>
      %35 = vector.broadcast %34 : vector<24x1xf32> to vector<24x128xf32>
      %36 = arith.mulf %26, %35 : vector<24x128xf32>
      %c0_22 = arith.constant 0 : index
      %c0_23 = arith.constant 0 : index
      %37 = vector.load %arg3[%c0_22, %c0_23] : memref<1x128xf32, #tpu.memory_space<vmem>>, vector<1x128xf32>
      %38 = vector.broadcast %37 : vector<1x128xf32> to vector<24x128xf32>
      %39 = arith.mulf %36, %38 : vector<24x128xf32>
      %c0_24 = arith.constant 0 : index
      %c0_25 = arith.constant 0 : index
      %40 = vector.load %arg4[%c0_24, %c0_25] : memref<1x128xf32, #tpu.memory_space<vmem>>, vector<1x128xf32>
      %41 = vector.broadcast %40 : vector<1x128xf32> to vector<24x128xf32>
      %42 = arith.addf %39, %41 : vector<24x128xf32>
      %43 = arith.truncf %42 : vector<24x128xf32> to vector<24x128xbf16>
      %c0_26 = arith.constant 0 : index
      %c0_27 = arith.constant 0 : index
      %44 = vector.load %arg10[%c0_26, %c0_27] : memref<24x128xbf16, #tpu.memory_space<vmem>>, vector<24x128xbf16>
      tpu.vector_store %arg10[%c0_26, %c0_27], %43 {strides = array<i32>} : memref<24x128xbf16, #tpu.memory_space<vmem>>, vector<24x128xbf16>,
      %c0_28 = arith.constant 0 : index
      %c0_29 = arith.constant 0 : index
      %45 = vector.load %arg8[%c0_28, %c0_29] : memref<1x128xf32, #tpu.memory_space<vmem>>, vector<1x128xf32>
      %46 = vector.broadcast %45 : vector<1x128xf32> to vector<24x128xf32>
      %47 = arith.addf %20, %46 : vector<24x128xf32>
      %c0_30 = arith.constant 0 : index
      %c0_31 = arith.constant 0 : index
      %48 = vector.load %arg11[%c0_30, %c0_31] : memref<24x128xf32, #tpu.memory_space<vmem>>, vector<24x128xf32>
      tpu.vector_store %arg11[%c0_30, %c0_31], %47 {strides = array<i32>} : memref<24x128xf32, #tpu.memory_space<vmem>>, vector<24x128xf32>,
    } else {
    }
    %c0 = arith.constant 0 : index
    %c0_1 = arith.constant 0 : index
    %3 = vector.load %arg10[%c0, %c0_1] : memref<24x128xbf16, #tpu.memory_space<vmem>>, vector<24x128xbf16>
    %c0_2 = arith.constant 0 : index
    %c0_3 = arith.constant 0 : index
    %4 = vector.load %arg5[%c0_2, %c0_3] : memref<128x128xbf16, #tpu.memory_space<vmem>>, vector<128x128xbf16>
    %cst = arith.constant dense<0.000000e+00> : vector<24x128xf32>
    %5 = tpu.matmul %3, %4, %cst {dimension_numbers = #tpu.dot_dimension_numbers<[1], [0], [0], [1], [0, 0, 1, 1], [], []>} : vector<24x128xbf16>, vector<128x128xbf16>, vector<24x128xf32> -> vector<24x128xf32>
    %c0_4 = arith.constant 0 : index
    %c0_5 = arith.constant 0 : index
    %6 = vector.load %arg6[%c0_4, %c0_5] : memref<1x128xf32, #tpu.memory_space<vmem>>, vector<1x128xf32>
    %7 = vector.broadcast %6 : vector<1x128xf32> to vector<24x128xf32>
    %8 = arith.addf %5, %7 : vector<24x128xf32>
    %cst_6 = arith.constant 0.000000e+00 : f32
    %9 = vector.broadcast %cst_6 : f32 to vector<24x128xf32>
    %10 = arith.maximumf %8, %9 : vector<24x128xf32>
    %c0_7 = arith.constant 0 : index
    %c0_8 = arith.constant 0 : index
    %11 = vector.load %arg11[%c0_7, %c0_8] : memref<24x128xf32, #tpu.memory_space<vmem>>, vector<24x128xf32>
    %12 = arith.truncf %10 : vector<24x128xf32> to vector<24x128xbf16>
    %c0_9 = arith.constant 0 : index
    %c0_10 = arith.constant 0 : index
    %13 = vector.load %arg7[%c0_9, %c0_10] : memref<128x128xbf16, #tpu.memory_space<vmem>>, vector<128x128xbf16>
    %cst_11 = arith.constant dense<0.000000e+00> : vector<24x128xf32>
    %14 = tpu.matmul %12, %13, %cst_11 {dimension_numbers = #tpu.dot_dimension_numbers<[1], [0], [0], [1], [0, 0, 1, 1], [], []>} : vector<24x128xbf16>, vector<128x128xbf16>, vector<24x128xf32> -> vector<24x128xf32>
    %15 = arith.addf %11, %14 : vector<24x128xf32>
    %c0_12 = arith.constant 0 : index
    %c0_13 = arith.constant 0 : index
    %16 = vector.load %arg11[%c0_12, %c0_13] : memref<24x128xf32, #tpu.memory_space<vmem>>, vector<24x128xf32>
    tpu.vector_store %arg11[%c0_12, %c0_13], %15 {strides = array<i32>} : memref<24x128xf32, #tpu.memory_space<vmem>>, vector<24x128xf32>,
    %c2_i32 = arith.constant 2 : i32
    %17 = arith.cmpi eq, %arg1, %c2_i32 : i32
    %18 = arith.extui %17 : i1 to i32
    %c0_i32_14 = arith.constant 0 : i32
    %19 = arith.cmpi ne, %18, %c0_i32_14 : i32
    scf.if %19 {
      %c0_15 = arith.constant 0 : index
      %c0_16 = arith.constant 0 : index
      %20 = vector.load %arg11[%c0_15, %c0_16] : memref<24x128xf32, #tpu.memory_space<vmem>>, vector<24x128xf32>
      %c0_17 = arith.constant 0 : index
      %c0_18 = arith.constant 0 : index
      %21 = vector.load %arg9[%c0_17, %c0_18] : memref<24x128xf32, #tpu.memory_space<vmem>>, vector<24x128xf32>
      tpu.vector_store %arg9[%c0_17, %c0_18], %20 {strides = array<i32>} : memref<24x128xf32, #tpu.memory_space<vmem>>, vector<24x128xf32>,
    } else {
    }
    return
  }
  func.func @transform_0(%arg0: i32, %arg1: i32) -> (i32, i32) {
    %c0_i32 = arith.constant 0 : i32
    %c0_i32_0 = arith.constant 0 : i32
    return %arg0, %c0_i32 : i32, i32
  }
  func.func @transform_1(%arg0: i32, %arg1: i32) -> (i32, i32) {
    %c0_i32 = arith.constant 0 : i32
    %c0_i32_0 = arith.constant 0 : i32
    %c0_i32_1 = arith.constant 0 : i32
    return %c0_i32, %c0_i32_0 : i32, i32
  }
  func.func @transform_2(%arg0: i32, %arg1: i32) -> (i32, i32) {
    %c0_i32 = arith.constant 0 : i32
    %c0_i32_0 = arith.constant 0 : i32
    %c0_i32_1 = arith.constant 0 : i32
    return %c0_i32, %c0_i32_0 : i32, i32
  }
  func.func @transform_3(%arg0: i32, %arg1: i32) -> (i32, i32) {
    %c0_i32 = arith.constant 0 : i32
    %c0_i32_0 = arith.constant 0 : i32
    return %c0_i32, %arg1 : i32, i32
  }
  func.func @transform_4(%arg0: i32, %arg1: i32) -> (i32, i32) {
    %c0_i32 = arith.constant 0 : i32
    %c0_i32_0 = arith.constant 0 : i32
    return %c0_i32, %arg1 : i32, i32
  }
  func.func @transform_5(%arg0: i32, %arg1: i32) -> (i32, i32) {
    %c0_i32 = arith.constant 0 : i32
    %c0_i32_0 = arith.constant 0 : i32
    return %arg1, %c0_i32 : i32, i32
  }
  func.func @transform_6(%arg0: i32, %arg1: i32) -> (i32, i32) {
    %c0_i32 = arith.constant 0 : i32
    %c0_i32_0 = arith.constant 0 : i32
    %c0_i32_1 = arith.constant 0 : i32
    return %c0_i32, %c0_i32_0 : i32, i32
  }
  func.func @transform_7(%arg0: i32, %arg1: i32) -> (i32, i32) {
    %c0_i32 = arith.constant 0 : i32
    %c0_i32_0 = arith.constant 0 : i32
    return %arg0, %c0_i32 : i32, i32
  }
}

</mosaic_0001>

<llo_original>
// kernel: tpu_custom_call.1
$region0: #{tpu_custom_call.1}
  #allocation0 [shape = 'u32[]', space=smem, size = 0x4, offset = 0x4, fixed_abs, tag = 'smem constant byte address 0x4 - core index']
  #allocation1 [shape = 'u32[144,128]{1,0:T(1,128)}', space=vmem, size = 0x12000, scoped, tag = 'internal scratch']
  #allocation2 [shape = 'bf16[24,128]{1,0:T(8,128)(2,1)}', space=vmem, size = 0x1800, scoped, tag = 'scratch operand']
  #allocation3 [shape = 'f32[24,128]{1,0:T(8,128)}', space=vmem, size = 0x3000, scoped, tag = 'scratch operand']
  %s0 = inlined_call_operand.hbm [shape: f32[24,128], index: 0, kind: input, shape index: {}]
  %s1 = inlined_call_operand.hbm [shape: f32[1,128], index: 1, kind: input, shape index: {}]
  %s2 = inlined_call_operand.hbm [shape: f32[1,128], index: 2, kind: input, shape index: {}]
  %s3 = inlined_call_operand.hbm [shape: bf16[128,384], index: 3, kind: input, shape index: {}]
  %s4 = inlined_call_operand.hbm [shape: f32[1,384], index: 4, kind: input, shape index: {}]
  %s5 = inlined_call_operand.hbm [shape: bf16[384,128], index: 5, kind: input, shape index: {}]
  %s6 = inlined_call_operand.hbm [shape: f32[1,128], index: 6, kind: input, shape index: {}]
  %s7 = inlined_call_operand.hbm [shape: f32[24,128], index: 7, kind: output, shape index: {}]
  %s8 = sld [smem:[#allocation0]]
  $region97: #{tpu_custom_call.1} parent=0
    _
  %s10 = ssub.s32 1, %s8
  %s11 = scalar_select 0, %s10, %s8
  $region1: #{tpu_custom_call.1} parent=0
    #allocation4 [shape = 'u8[12288]{0}', space=vmem, size = 0x3000, scoped, tag = 'input window, operand 0, single buffered']
    #allocation5 [shape = 's32[2]{0}', space=sflag, size = 0x8, scoped, tag = 'scoped memory for tpu_custom_call.1']
    #allocation6 [shape = 's32[2]{0}', space=sflag, size = 0x8, scoped, tag = 'scoped memory for tpu_custom_call.1']
    #allocation7 [shape = 'u8[512]{0}', space=vmem, size = 0x400, scoped, tag = 'input window, operand 1, single buffered']
    #allocation8 [shape = 's32[1]{0}', space=sflag, size = 0x4, scoped, tag = 'scoped memory for tpu_custom_call.1']
    #allocation9 [shape = 'u8[512]{0}', space=vmem, size = 0x400, scoped, tag = 'input window, operand 2, single buffered']
    #allocation10 [shape = 'u8[65536]{0}', space=vmem, size = 0x10000, scoped, tag = 'input window, operand 3']
    #allocation11 [shape = 's32[2]{0}', space=sflag, size = 0x8, scoped, tag = 'scoped memory for tpu_custom_call.1']
    #allocation12 [shape = 'u8[1024]{0}', space=vmem, size = 0x400, scoped, tag = 'input window, operand 4']
    #allocation13 [shape = 'u8[65536]{0}', space=vmem, size = 0x10000, scoped, tag = 'input window, operand 5']
    #allocation14 [shape = 's32[2]{0}', space=sflag, size = 0x8, scoped, tag = 'scoped memory for tpu_custom_call.1']
    #allocation15 [shape = 'u8[512]{0}', space=vmem, size = 0x400, scoped, tag = 'input window, operand 6, single buffered']
    #allocation16 [shape = 'u8[12288]{0}', space=vmem, size = 0x3000, scoped, tag = 'output window, operand 0, single buffered']
    %12 = vsyncpa [#allocation5], 0
    %13 = vsyncpa [#allocation8], 0
    %14 = vsyncpa [#allocation11], 0
    %s15 = scalar_lea.sflag [#allocation11], 1
    %16 = vsyncpa %s15, 0
    %17 = vsyncpa [#allocation14], 0
    %s18 = scalar_lea.sflag [#allocation14], 1
    %19 = vsyncpa %s18, 0
    %20 = vsyncpa [#allocation6], 0
    loop: start=0, step=1, limit=5
    $region2: #{tpu_custom_call.1} parent=1 // loop_pre_header
      _
    $region3: #{tpu_custom_call.1} parent=1 // loop_header
      %s22 = sphi 0, %s26
      %p23 = scmp.ge.s32.totalorder %s22, 5
      %s29 = sphi 0, %s41
      %s30 = sphi 0, %s37
      %s31 = sphi 0, %s29
      %s32 = sphi 0, %s30
      %s33 = sphi 0, %s31
      %s34 = sphi 0, %s32
      %s44 = sphi 0, %s46
      %s47 = sphi 0, %s44
      %s48 = sphi 0, %s47
      %s64 = sphi 0, %s48
      %s68 = sphi 0, %s68
      %s70 = sphi 0, %s68
      %s71 = sphi 0, %s70
      %s85 = sphi 0, %s71
      %s89 = sphi 0, %s89
      %s91 = sphi 0, %s89
      %s92 = sphi 0, %s91
      %s106 = sphi 0, %s92
      %s112 = sphi 0, %s114
      %s115 = sphi 0, %s112
      %s116 = sphi 0, %s115
      %s132 = sphi 0, %s116
      %s138 = sphi 0, %s140
      %s141 = sphi 0, %s138
      %s142 = sphi 0, %s141
      %s158 = sphi 0, %s142
      %s164 = sphi 0, %s166
      %s167 = sphi 0, %s164
      %s168 = sphi 0, %s167
      %s184 = sphi 0, %s168
      %s188 = sphi 0, %s188
      %s190 = sphi 0, %s188
      %s191 = sphi 0, %s190
      %s205 = sphi 0, %s191
      %s211 = sphi 0, %s213
      %s214 = sphi 0, %s211
      %s215 = sphi 0, %s214
      %s231 = sphi 0, %s215
    $region4: #{tpu_custom_call.1} parent=1 // loop_header_branch
      %25 = sbr.rel (%p23) target = $region8
    $region5: #{tpu_custom_call.1} parent=1 // loop_body
      %s27 = ssub.s32 %s22, 1
      %s28 = ssub.s32 %s22, 2
      %s35 = sadd.s32 1, %s30
      %p36 = scmp.ge.s32.totalorder %s35, 3
      %s37 = scalar_select %p36, 0, %s35
      %s38 = sadd.s32 1, %s29
      %s39 = scalar_select %p36, %s38, %s29
      %p40 = scmp.ge.s32.totalorder %s39, 1
      %s41 = scalar_select %p40, 0, %s39
      %s42 = ssub.s32 %s29, %s41
      %p43 = scmp.eq.s32.totalorder %s42, 0
      %s45 = sadd.s32 %s44, 1
      %s46 = scalar_select %p43, %s44, %s45
      %p49 = pneg %p43
      %p50 = scmp.eq.s32.totalorder %s22, 2
      %p51 = por %p49, %p50
      %p52 = scmp.ne.s32.totalorder %s44, %s47
      %p53 = scmp.eq.s32.totalorder %s22, 0
      %p54 = por %p52, %p53
      %p55 = scmp.ne.s32.totalorder %s44, %s47
      %p56 = scmp.eq.s32.totalorder %s27, 2
      %p57 = por %p55, %p56
      %p58 = scmp.ne.s32.totalorder %s47, %s48
      %p59 = scmp.eq.s32.totalorder %s27, 0
      %p60 = por %p58, %p59
      %p61 = scmp.ne.s32.totalorder %s47, %s48
      %p62 = scmp.eq.s32.totalorder %s28, 2
      %p63 = por %p61, %p62
      %p65 = scmp.ne.s32.totalorder %s48, %s64
      %p66 = scmp.eq.s32.totalorder %s28, 0
      %p67 = por %p65, %p66
      %s69 = sadd.s32 %s68, 1
      %p72 = scmp.eq.s32.totalorder %s22, 2
      %p73 = scmp.ne.s32.totalorder %s68, %s70
      %p74 = scmp.eq.s32.totalorder %s22, 0
      %p75 = por %p73, %p74
      %p76 = scmp.ne.s32.totalorder %s68, %s70
      %p77 = scmp.eq.s32.totalorder %s27, 2
      %p78 = por %p76, %p77
      %p79 = scmp.ne.s32.totalorder %s70, %s71
      %p80 = scmp.eq.s32.totalorder %s27, 0
      %p81 = por %p79, %p80
      %p82 = scmp.ne.s32.totalorder %s70, %s71
      %p83 = scmp.eq.s32.totalorder %s28, 2
      %p84 = por %p82, %p83
      %p86 = scmp.ne.s32.totalorder %s71, %s85
      %p87 = scmp.eq.s32.totalorder %s28, 0
      %p88 = por %p86, %p87
      %s90 = sadd.s32 %s89, 1
      %p93 = scmp.eq.s32.totalorder %s22, 2
      %p94 = scmp.ne.s32.totalorder %s89, %s91
      %p95 = scmp.eq.s32.totalorder %s22, 0
      %p96 = por %p94, %p95
      %p97 = scmp.ne.s32.totalorder %s89, %s91
      %p98 = scmp.eq.s32.totalorder %s27, 2
      %p99 = por %p97, %p98
      %p100 = scmp.ne.s32.totalorder %s91, %s92
      %p101 = scmp.eq.s32.totalorder %s27, 0
      %p102 = por %p100, %p101
      %p103 = scmp.ne.s32.totalorder %s91, %s92
      %p104 = scmp.eq.s32.totalorder %s28, 2
      %p105 = por %p103, %p104
      %p107 = scmp.ne.s32.totalorder %s92, %s106
      %p108 = scmp.eq.s32.totalorder %s28, 0
      %p109 = por %p107, %p108
      %s110 = ssub.s32 %s30, %s37
      %p111 = scmp.eq.s32.totalorder %s110, 0
      %s113 = sadd.s32 %s112, 1
      %s114 = scalar_select %p111, %s112, %s113
      %p117 = pneg %p111
      %p118 = scmp.eq.s32.totalorder %s22, 2
      %p119 = por %p117, %p118
      %p120 = scmp.ne.s32.totalorder %s112, %s115
      %p121 = scmp.eq.s32.totalorder %s22, 0
      %p122 = por %p120, %p121
      %p123 = scmp.ne.s32.totalorder %s112, %s115
      %p124 = scmp.eq.s32.totalorder %s27, 2
      %p125 = por %p123, %p124
      %p126 = scmp.ne.s32.totalorder %s115, %s116
      %p127 = scmp.eq.s32.totalorder %s27, 0
      %p128 = por %p126, %p127
      %p129 = scmp.ne.s32.totalorder %s115, %s116
      %p130 = scmp.eq.s32.totalorder %s28, 2
      %p131 = por %p129, %p130
      %p133 = scmp.ne.s32.totalorder %s116, %s132
      %p134 = scmp.eq.s32.totalorder %s28, 0
      %p135 = por %p133, %p134
      %s136 = ssub.s32 %s30, %s37
      %p137 = scmp.eq.s32.totalorder %s136, 0
      %s139 = sadd.s32 %s138, 1
      %s140 = scalar_select %p137, %s138, %s139
      %p143 = pneg %p137
      %p144 = scmp.eq.s32.totalorder %s22, 2
      %p145 = por %p143, %p144
      %p146 = scmp.ne.s32.totalorder %s138, %s141
      %p147 = scmp.eq.s32.totalorder %s22, 0
      %p148 = por %p146, %p147
      %p149 = scmp.ne.s32.totalorder %s138, %s141
      %p150 = scmp.eq.s32.totalorder %s27, 2
      %p151 = por %p149, %p150
      %p152 = scmp.ne.s32.totalorder %s141, %s142
      %p153 = scmp.eq.s32.totalorder %s27, 0
      %p154 = por %p152, %p153
      %p155 = scmp.ne.s32.totalorder %s141, %s142
      %p156 = scmp.eq.s32.totalorder %s28, 2
      %p157 = por %p155, %p156
      %p159 = scmp.ne.s32.totalorder %s142, %s158
      %p160 = scmp.eq.s32.totalorder %s28, 0
      %p161 = por %p159, %p160
      %s162 = ssub.s32 %s30, %s37
      %p163 = scmp.eq.s32.totalorder %s162, 0
      %s165 = sadd.s32 %s164, 1
      %s166 = scalar_select %p163, %s164, %s165
      %p169 = pneg %p163
      %p170 = scmp.eq.s32.totalorder %s22, 2
      %p171 = por %p169, %p170
      %p172 = scmp.ne.s32.totalorder %s164, %s167
      %p173 = scmp.eq.s32.totalorder %s22, 0
      %p174 = por %p172, %p173
      %p175 = scmp.ne.s32.totalorder %s164, %s167
      %p176 = scmp.eq.s32.totalorder %s27, 2
      %p177 = por %p175, %p176
      %p178 = scmp.ne.s32.totalorder %s167, %s168
      %p179 = scmp.eq.s32.totalorder %s27, 0
      %p180 = por %p178, %p179
      %p181 = scmp.ne.s32.totalorder %s167, %s168
      %p182 = scmp.eq.s32.totalorder %s28, 2
      %p183 = por %p181, %p182
      %p185 = scmp.ne.s32.totalorder %s168, %s184
      %p186 = scmp.eq.s32.totalorder %s28, 0
      %p187 = por %p185, %p186
      %s189 = sadd.s32 %s188, 1
      %p192 = scmp.eq.s32.totalorder %s22, 2
      %p193 = scmp.ne.s32.totalorder %s188, %s190
      %p194 = scmp.eq.s32.totalorder %s22, 0
      %p195 = por %p193, %p194
      %p196 = scmp.ne.s32.totalorder %s188, %s190
      %p197 = scmp.eq.s32.totalorder %s27, 2
      %p198 = por %p196, %p197
      %p199 = scmp.ne.s32.totalorder %s190, %s191
      %p200 = scmp.eq.s32.totalorder %s27, 0
      %p201 = por %p199, %p200
      %p202 = scmp.ne.s32.totalorder %s190, %s191
      %p203 = scmp.eq.s32.totalorder %s28, 2
      %p204 = por %p202, %p203
      %p206 = scmp.ne.s32.totalorder %s191, %s205
      %p207 = scmp.eq.s32.totalorder %s28, 0
      %p208 = por %p206, %p207
      %s209 = ssub.s32 %s29, %s41
      %p210 = scmp.eq.s32.totalorder %s209, 0
      %s212 = sadd.s32 %s211, 1
      %s213 = scalar_select %p210, %s211, %s212
      %p216 = pneg %p210
      %p217 = scmp.eq.s32.totalorder %s22, 2
      %p218 = por %p216, %p217
      %p219 = scmp.ne.s32.totalorder %s211, %s214
      %p220 = scmp.eq.s32.totalorder %s22, 0
      %p221 = por %p219, %p220
      %p222 = scmp.ne.s32.totalorder %s211, %s214
      %p223 = scmp.eq.s32.totalorder %s27, 2
      %p224 = por %p222, %p223
      %p225 = scmp.ne.s32.totalorder %s214, %s215
      %p226 = scmp.eq.s32.totalorder %s27, 0
      %p227 = por %p225, %p226
      %p228 = scmp.ne.s32.totalorder %s214, %s215
      %p229 = scmp.eq.s32.totalorder %s28, 2
      %p230 = por %p228, %p229
      %p232 = scmp.ne.s32.totalorder %s215, %s231
      %p233 = scmp.eq.s32.totalorder %s28, 0
      %p234 = por %p232, %p233
      %p235 = scmp.le.s32.totalorder 1, %s22
      %p236 = scmp.lt.s32.totalorder %s22, 4
      %p237 = pnand %p235, %p236
      %p238 = pneg %p237
      // Predicated region
      $region9: #{tpu_custom_call.1} parent=5 // pred_check
        _
      $region10: #{tpu_custom_call.1} parent=5 // pred_check_branch
        %240 = sbr.rel (%p237) target = $region12
      $region11: #{tpu_custom_call.1} parent=5 // pred_region
        %s241 = ssub.s32 %s22, 1
        // Predicated region
        $region13: #{tpu_custom_call.1} parent=11 // pred_check
          %p242 = pneg %p60
        $region14: #{tpu_custom_call.1} parent=11 // pred_check_branch
          %244 = sbr.rel (%p242) target = $region16
        $region15: #{tpu_custom_call.1} parent=11 // pred_region
          %s245 = smul.u32 3, %s31
          %s247 = ssub.s32 384, 384
          %248 = vsyncadd [#allocation5], %s247
          %s249 = smul.addr %s245, 128
          %s250 = scalar_lea.hbm %s0, %s249
          %s251 = sshll.u32 [#allocation4], 4
          %s252 = int_to_ptr.vmem [resolvable:$true] %s251
          %257 = dma.hbm_to_vmem [thread:$0]  %s250, 384, %s252, [#allocation5], 128, 128, 8
        $region16: #{tpu_custom_call.1} parent=11 // pred_fallthru
          _
        // Predicated region
        $region17: #{tpu_custom_call.1} parent=11 // pred_check
          %p258 = pneg %p81
        $region18: #{tpu_custom_call.1} parent=11 // pred_check_branch
          %260 = sbr.rel (%p258) target = $region20
        $region19: #{tpu_custom_call.1} parent=11 // pred_region
          %s262 = ssub.s32 16, 16
          %263 = vsyncadd [#allocation8], %s262
          %s265 = sshll.u32 [#allocation7], 4
          %s266 = int_to_ptr.vmem [resolvable:$true] %s265
          %268 = dma.hbm_to_vmem [thread:$0]  %s1, 16, %s266, [#allocation8]
        $region20: #{tpu_custom_call.1} parent=11 // pred_fallthru
          _
        // Predicated region
        $region21: #{tpu_custom_call.1} parent=11 // pred_check
          %p269 = pneg %p102
        $region22: #{tpu_custom_call.1} parent=11 // pred_check_branch
          %271 = sbr.rel (%p269) target = $region24
        $region23: #{tpu_custom_call.1} parent=11 // pred_region
          %s273 = ssub.s32 16, 16
          %274 = vsyncadd [#allocation8], %s273
          %s276 = sshll.u32 [#allocation9], 4
          %s277 = int_to_ptr.vmem [resolvable:$true] %s276
          %279 = dma.hbm_to_vmem [thread:$0]  %s2, 16, %s277, [#allocation8]
        $region24: #{tpu_custom_call.1} parent=11 // pred_fallthru
          _
        // Predicated region
        $region25: #{tpu_custom_call.1} parent=11 // pred_check
          %p280 = pneg %p201
        $region26: #{tpu_custom_call.1} parent=11 // pred_check_branch
          %282 = sbr.rel (%p280) target = $region28
        $region27: #{tpu_custom_call.1} parent=11 // pred_region
          %s284 = ssub.s32 16, 16
          %285 = vsyncadd [#allocation14], %s284
          %s287 = sshll.u32 [#allocation15], 4
          %s288 = int_to_ptr.vmem [resolvable:$true] %s287
          %290 = dma.hbm_to_vmem [thread:$0]  %s6, 16, %s288, [#allocation14]
        $region28: #{tpu_custom_call.1} parent=11 // pred_fallthru
          _
      $region12: #{tpu_custom_call.1} parent=5 // pred_fallthru
        _
      %p291 = scmp.lt.s32.totalorder %s22, 3
      // Predicated region
      $region29: #{tpu_custom_call.1} parent=5 // pred_check
        %p292 = pneg %p291
      $region30: #{tpu_custom_call.1} parent=5 // pred_check_branch
        %294 = sbr.rel (%p292) target = $region32
      $region31: #{tpu_custom_call.1} parent=5 // pred_region
        // Predicated region
        $region33: #{tpu_custom_call.1} parent=31 // pred_check
          %p295 = pneg %p122
        $region34: #{tpu_custom_call.1} parent=31 // pred_check_branch
          %297 = sbr.rel (%p295) target = $region36
        $region35: #{tpu_custom_call.1} parent=31 // pred_region
          %s298 = sand.u32 %s22, 1
          %s299 = scalar_lea.sflag [#allocation11], %s298
          %s300 = sand.u32 %s112, 1
          %s301 = smul.addr %s300, 64
          %s302 = scalar_lea.vmem [#allocation10], %s301
          %s304 = ssub.s32 1024, 1024
          %305 = vsyncadd %s299, %s304
          %s306 = smul.addr %s30, 64
          %s307 = scalar_lea.hbm %s3, %s306
          %s308 = sshll.u32 %s302, 4
          %s309 = int_to_ptr.vmem [resolvable:$true] %s308
          %314 = dma.hbm_to_vmem [thread:$0]  %s307, 1024, %s309, %s299, 192, 64, 4
        $region36: #{tpu_custom_call.1} parent=31 // pred_fallthru
          _
        // Predicated region
        $region37: #{tpu_custom_call.1} parent=31 // pred_check
          %p315 = pneg %p148
        $region38: #{tpu_custom_call.1} parent=31 // pred_check_branch
          %317 = sbr.rel (%p315) target = $region40
        $region39: #{tpu_custom_call.1} parent=31 // pred_region
          %s318 = sand.u32 %s22, 1
          %s319 = scalar_lea.sflag [#allocation11], %s318
          %s320 = sand.u32 %s138, 1
          %s321 = scalar_lea.vmem [#allocation12], %s320
          %s323 = ssub.s32 16, 16
          %324 = vsyncadd %s319, %s323
          %s325 = smul.addr %s30, 16
          %s326 = scalar_lea.hbm %s4, %s325
          %s328 = sshll.u32 %s321, 4
          %s329 = int_to_ptr.vmem [resolvable:$true] %s328
          %331 = dma.hbm_to_vmem [thread:$0]  %s326, 16, %s329, %s319
        $region40: #{tpu_custom_call.1} parent=31 // pred_fallthru
          _
        // Predicated region
        $region41: #{tpu_custom_call.1} parent=31 // pred_check
          %p332 = pneg %p174
        $region42: #{tpu_custom_call.1} parent=31 // pred_check_branch
          %334 = sbr.rel (%p332) target = $region44
        $region43: #{tpu_custom_call.1} parent=31 // pred_region
          %s335 = sand.u32 %s22, 1
          %s336 = scalar_lea.sflag [#allocation14], %s335
          %s337 = sand.u32 %s164, 1
          %s338 = smul.addr %s337, 64
          %s339 = scalar_lea.vmem [#allocation13], %s338
          %s340 = smul.u32 16, %s30
          %s342 = ssub.s32 1024, 1024
          %343 = vsyncadd %s336, %s342
          %s344 = smul.addr %s340, 64
          %s345 = scalar_lea.hbm %s5, %s344
          %s346 = sshll.u32 %s339, 4
          %s347 = int_to_ptr.vmem [resolvable:$true] %s346
          %352 = dma.hbm_to_vmem [thread:$0]  %s345, 1024, %s347, %s336, 64, 64, 4
        $region44: #{tpu_custom_call.1} parent=31 // pred_fallthru
          _
      $region32: #{tpu_custom_call.1} parent=5 // pred_fallthru
        _
      %p353 = scmp.le.s32.totalorder 1, %s22
      %p354 = scmp.lt.s32.totalorder %s22, 4
      %p355 = pnand %p353, %p354
      %p356 = pneg %p355
      // Predicated region
      $region45: #{tpu_custom_call.1} parent=5 // pred_check
        _
      $region46: #{tpu_custom_call.1} parent=5 // pred_check_branch
        %358 = sbr.rel (%p355) target = $region48
      $region47: #{tpu_custom_call.1} parent=5 // pred_region
        %s359 = ssub.s32 %s22, 1
        // Predicated region
        $region49: #{tpu_custom_call.1} parent=47 // pred_check
          %p360 = pneg %p60
        $region50: #{tpu_custom_call.1} parent=47 // pred_check_branch
          %362 = sbr.rel (%p360) target = $region52
        $region51: #{tpu_custom_call.1} parent=47 // pred_region
          %363 = dma.done [#allocation5], 384
        $region52: #{tpu_custom_call.1} parent=47 // pred_fallthru
          _
        // Predicated region
        $region53: #{tpu_custom_call.1} parent=47 // pred_check
          %p364 = pneg %p81
        $region54: #{tpu_custom_call.1} parent=47 // pred_check_branch
          %366 = sbr.rel (%p364) target = $region56
        $region55: #{tpu_custom_call.1} parent=47 // pred_region
          %367 = dma.done [#allocation8], 16
        $region56: #{tpu_custom_call.1} parent=47 // pred_fallthru
          _
        // Predicated region
        $region57: #{tpu_custom_call.1} parent=47 // pred_check
          %p368 = pneg %p102
        $region58: #{tpu_custom_call.1} parent=47 // pred_check_branch
          %370 = sbr.rel (%p368) target = $region60
        $region59: #{tpu_custom_call.1} parent=47 // pred_region
          %371 = dma.done [#allocation8], 16
        $region60: #{tpu_custom_call.1} parent=47 // pred_fallthru
          _
        %s372 = sand.u32 %s27, 1
        %s373 = scalar_lea.sflag [#allocation11], %s372
        %s374 = sand.u32 %s115, 1
        %s375 = smul.addr %s374, 64
        %s376 = scalar_lea.vmem [#allocation10], %s375
        // Predicated region
        $region61: #{tpu_custom_call.1} parent=47 // pred_check
          %p377 = pneg %p128
        $region62: #{tpu_custom_call.1} parent=47 // pred_check_branch
          %379 = sbr.rel (%p377) target = $region64
        $region63: #{tpu_custom_call.1} parent=47 // pred_region
          %380 = dma.done %s373, 1024
        $region64: #{tpu_custom_call.1} parent=47 // pred_fallthru
          _
        %s381 = sand.u32 %s27, 1
        %s382 = scalar_lea.sflag [#allocation11], %s381
        %s383 = sand.u32 %s141, 1
        %s384 = scalar_lea.vmem [#allocation12], %s383
        // Predicated region
        $region65: #{tpu_custom_call.1} parent=47 // pred_check
          %p385 = pneg %p154
        $region66: #{tpu_custom_call.1} parent=47 // pred_check_branch
          %387 = sbr.rel (%p385) target = $region68
        $region67: #{tpu_custom_call.1} parent=47 // pred_region
          %388 = dma.done %s382, 16
        $region68: #{tpu_custom_call.1} parent=47 // pred_fallthru
          _
        %s389 = sand.u32 %s27, 1
        %s390 = scalar_lea.sflag [#allocation14], %s389
        %s391 = sand.u32 %s167, 1
        %s392 = smul.addr %s391, 64
        %s393 = scalar_lea.vmem [#allocation13], %s392
        // Predicated region
        $region69: #{tpu_custom_call.1} parent=47 // pred_check
          %p394 = pneg %p180
        $region70: #{tpu_custom_call.1} parent=47 // pred_check_branch
          %396 = sbr.rel (%p394) target = $region72
        $region71: #{tpu_custom_call.1} parent=47 // pred_region
          %397 = dma.done %s390, 1024
        $region72: #{tpu_custom_call.1} parent=47 // pred_fallthru
          _
        // Predicated region
        $region73: #{tpu_custom_call.1} parent=47 // pred_check
          %p398 = pneg %p201
        $region74: #{tpu_custom_call.1} parent=47 // pred_check_branch
          %400 = sbr.rel (%p398) target = $region76
        $region75: #{tpu_custom_call.1} parent=47 // pred_region
          %401 = dma.done [#allocation14], 16
        $region76: #{tpu_custom_call.1} parent=47 // pred_fallthru
          _
        %p402 = pneg %p60
        %p403 = pneg %p57
        %p404 = pneg %p81
        %p405 = pneg %p78
        %p406 = pneg %p102
        %p407 = pneg %p99
        %s408 = sand.u32 %s27, 1
        %s409 = scalar_lea.sflag [#allocation11], %s408
        %s410 = sand.u32 %s115, 1
        %s411 = smul.addr %s410, 64
        %s412 = scalar_lea.vmem [#allocation10], %s411
        %p413 = pneg %p128
        %p414 = pneg %p125
        %s415 = sand.u32 %s27, 1
        %s416 = scalar_lea.sflag [#allocation11], %s415
        %s417 = sand.u32 %s141, 1
        %s418 = scalar_lea.vmem [#allocation12], %s417
        %p419 = pneg %p154
        %p420 = pneg %p151
        %s421 = sand.u32 %s27, 1
        %s422 = scalar_lea.sflag [#allocation14], %s421
        %s423 = sand.u32 %s167, 1
        %s424 = smul.addr %s423, 64
        %s425 = scalar_lea.vmem [#allocation13], %s424
        %p426 = pneg %p180
        %p427 = pneg %p177
        %p428 = pneg %p201
        %p429 = pneg %p198
        %p430 = pneg %p227
        %p431 = pneg %p224
        %s432 = smul.u32 3, %s31
        %s433 = smul.u32 16, %s32
        %s434 = smul.u32 3, %s31
        %p436 = scmp.eq.s32.totalorder %s32, 0
        // Predicated region
        $region77: #{tpu_custom_call.1} parent=47 // pred_check
          %p437 = pneg %p436
        $region78: #{tpu_custom_call.1} parent=47 // pred_check_branch
          %439 = sbr.rel (%p437) target = $region80
        $region79: #{tpu_custom_call.1} parent=47 // pred_region
          %v440 = vld [vmem:[#allocation4] sm:$0xff]
          %v441 = vld [vmem:[#allocation4 + $0x8] sm:$0xff]
          %v442 = vld [vmem:[#allocation4 + $0x10] sm:$0xff]
          %443 = vadd.xlane.f32.xlu0 %v440
          %v444 = vpop.xlane.xlu0 %443
          %445 = vadd.xlane.f32.xlu0 %v441
          %v446 = vpop.xlane.xlu0 %445
          %447 = vadd.xlane.f32.xlu0 %v442
          %v448 = vpop.xlane.xlu0 %447
          %v449 = vrcp.pop 128.0
          %v450 = vmul.f32 %v444, %v449
          %v451 = vmul.f32 %v446, %v449
          %v452 = vmul.f32 %v448, %v449
          %v453 = vsub.f32 %v440, %v450
          %v454 = vsub.f32 %v441, %v451
          %v455 = vsub.f32 %v442, %v452
          %v456 = vmul.f32 %v453, %v453
          %v457 = vmul.f32 %v454, %v454
          %v458 = vmul.f32 %v455, %v455
          %459 = vadd.xlane.f32.xlu0 %v456
          %v460 = vpop.xlane.xlu0 %459
          %461 = vadd.xlane.f32.xlu0 %v457
          %v462 = vpop.xlane.xlu0 %461
          %463 = vadd.xlane.f32.xlu0 %v458
          %v464 = vpop.xlane.xlu0 %463
          %v465 = vmul.f32 %v460, %v449
          %v466 = vmul.f32 %v462, %v449
          %v467 = vmul.f32 %v464, %v449
          %v468 = vadd.f32 %v465, 1e-05
          %v469 = vadd.f32 %v466, 1e-05
          %v470 = vadd.f32 %v467, 1e-05
          %v471 = vrsqrt.pop %v468
          %v472 = vrsqrt.pop %v469
          %v473 = vrsqrt.pop %v470
          %v474 = vmul.f32 %v453, %v471
          %v475 = vmul.f32 %v454, %v472
          %v476 = vmul.f32 %v455, %v473
          %v477 = vld [vmem:[#allocation7] sm:$0x1]
          %v479 = vlaneseq
          %v480 = vshrl.u32 %v479, 7
          %v481 = vsub.s32 0, %v480
          %v482 = vrot.slane %v477, %v481
          %v484 = vmul.f32 %v474, %v482
          %v485 = vmul.f32 %v475, %v482
          %v486 = vmul.f32 %v476, %v482
          %v487 = vld [vmem:[#allocation9] sm:$0x1]
          %v489 = vlaneseq
          %v490 = vshrl.u32 %v489, 7
          %v491 = vsub.s32 0, %v490
          %v492 = vrot.slane %v487, %v491
          %v494 = vadd.f32 %v484, %v492
          %v495 = vadd.f32 %v485, %v492
          %v496 = vadd.f32 %v486, %v492
          %v497 = vpack.c.bf16 %v495, %v494
          %v498 = vpack.c.bf16 %v496, %v496
          %v501 = vunpack.c.l.b16 %v497
          %v502 = vunpack.c.h.b16 %v497
          %v503 = vunpack.c.l.b16 %v498
          %v504 = vpack.c.b16 %v501, %v501
          %v505 = vpack.c.b16 %v502, %v502
          %v506 = vpack.c.b16 %v503, %v503
          %510 = vst [vmem:[#allocation2] sm:$0xf] %v504
          %511 = vst [vmem:[#allocation2 + $0x4] sm:$0xf] %v505
          %512 = vst [vmem:[#allocation2 + $0x8] sm:$0xf] %v506
          %v513 = vld [vmem:[#allocation15] sm:$0x1]
          %v515 = vlaneseq
          %v516 = vshrl.u32 %v515, 7
          %v517 = vsub.s32 0, %v516
          %v518 = vrot.slane %v513, %v517
          %v520 = vadd.f32 %v440, %v518
          %v521 = vadd.f32 %v441, %v518
          %v522 = vadd.f32 %v442, %v518
          %523 = vst [vmem:[#allocation3] sm:$0xff] %v520
          %524 = vst [vmem:[#allocation3 + $0x8] sm:$0xff] %v521
          %525 = vst [vmem:[#allocation3 + $0x10] sm:$0xff] %v522
        $region80: #{tpu_custom_call.1} parent=47 // pred_fallthru
          _
        %v526 = vld [vmem:[#allocation2] sm:$0xf]
        %v527 = vld [vmem:[#allocation2 + $0x4] sm:$0xf]
        %v528 = vld [vmem:[#allocation2 + $0x8] sm:$0xf]
        %v529 = vld [vmem:[%s376] sm:$0xf]
        %v530 = vld [vmem:[%s376 + $0x4] sm:$0xf]
        %v531 = vld [vmem:[%s376 + $0x8] sm:$0xf]
        %v532 = vld [vmem:[%s376 + $0xc] sm:$0xf]
        %v533 = vld [vmem:[%s376 + $0x10] sm:$0xf]
        %v534 = vld [vmem:[%s376 + $0x14] sm:$0xf]
        %v535 = vld [vmem:[%s376 + $0x18] sm:$0xf]
        %v536 = vld [vmem:[%s376 + $0x1c] sm:$0xf]
        %v537 = vld [vmem:[%s376 + $0x20] sm:$0xf]
        %v538 = vld [vmem:[%s376 + $0x24] sm:$0xf]
        %v539 = vld [vmem:[%s376 + $0x28] sm:$0xf]
        %v540 = vld [vmem:[%s376 + $0x2c] sm:$0xf]
        %v541 = vld [vmem:[%s376 + $0x30] sm:$0xf]
        %v542 = vld [vmem:[%s376 + $0x34] sm:$0xf]
        %v543 = vld [vmem:[%s376 + $0x38] sm:$0xf]
        %v544 = vld [vmem:[%s376 + $0x3c] sm:$0xf]
        %v545 = vld [vmem:[%s384] sm:$0x1]
        %v547 = vlaneseq
        %v548 = vshrl.u32 %v547, 7
        %v549 = vsub.s32 0, %v548
        %v550 = vrot.slane %v545, %v549
        %v555 = vunpack.c.l.b16 %v526
        %v556 = vunpack.c.l.b16 %v527
        %v557 = vunpack.c.l.b16 %v528
        %v558 = vpack.c.b16 %v556, %v555
        %v559 = vpack.c.b16 %v557, %v557
        %v578 = vunpack.c.l.b16 %v529
        %v579 = vunpack.c.l.b16 %v530
        %v580 = vunpack.c.l.b16 %v531
        %v581 = vunpack.c.l.b16 %v532
        %v582 = vunpack.c.l.b16 %v533
        %v583 = vunpack.c.l.b16 %v534
        %v584 = vunpack.c.l.b16 %v535
        %v585 = vunpack.c.l.b16 %v536
        %v586 = vunpack.c.l.b16 %v537
        %v587 = vunpack.c.l.b16 %v538
        %v588 = vunpack.c.l.b16 %v539
        %v589 = vunpack.c.l.b16 %v540
        %v590 = vunpack.c.l.b16 %v541
        %v591 = vunpack.c.l.b16 %v542
        %v592 = vunpack.c.l.b16 %v543
        %v593 = vunpack.c.l.b16 %v544
        %v594 = vpack.c.b16 %v579, %v578
        %v595 = vpack.c.b16 %v581, %v580
        %v596 = vpack.c.b16 %v583, %v582
        %v597 = vpack.c.b16 %v585, %v584
        %v598 = vpack.c.b16 %v587, %v586
        %v599 = vpack.c.b16 %v589, %v588
        %v600 = vpack.c.b16 %v591, %v590
        %v601 = vpack.c.b16 %v593, %v592
        %610 = vmatprep.subr.bf16.mxu0 0
        %611 = vmatpush1.bf16.msra.mxu0 %v594
        %612 = vmatprep.subr.bf16.mxu0 0
        %613 = vmatpush1.bf16.msra.mxu0 %v595
        %614 = vmatprep.subr.bf16.mxu0 0
        %615 = vmatpush1.bf16.msra.mxu0 %v596
        %616 = vmatprep.subr.bf16.mxu0 0
        %617 = vmatpush1.bf16.msra.mxu0 %v597
        %618 = vmatprep.subr.bf16.mxu0 0
        %619 = vmatpush1.bf16.msra.mxu0 %v598
        %620 = vmatprep.subr.bf16.mxu0 0
        %621 = vmatpush1.bf16.msra.mxu0 %v599
        %622 = vmatprep.subr.bf16.mxu0 0
        %623 = vmatpush1.bf16.msra.mxu0 %v600
        %624 = vmatprep.subr.bf16.mxu0 0
        %625 = vmatpush1.bf16.msra.mxu0 %v601
        %626 = vmatprep.subr.bf16.mxu0 0
        %627 = vmatpush1.bf16.msra.mxu0 0
        %628 = vmatprep.subr.bf16.mxu0 0
        %629 = vmatpush1.bf16.msra.mxu0 0
        %630 = vmatprep.subr.bf16.mxu0 0
        %631 = vmatpush1.bf16.msra.mxu0 0
        %632 = vmatprep.subr.bf16.mxu0 0
        %633 = vmatpush1.bf16.msra.mxu0 0
        %634 = vmatprep.subr.bf16.mxu0 0
        %635 = vmatpush1.bf16.msra.mxu0 0
        %636 = vmatprep.subr.bf16.mxu0 0
        %637 = vmatpush1.bf16.msra.mxu0 0
        %638 = vmatprep.subr.bf16.mxu0 0
        %639 = vmatpush1.bf16.msra.mxu0 0
        %640 = vmatprep.subr.bf16.mxu0 0
        %641 = vmatpush1.bf16.msra.mxu0 0
        %642 = vmatprep.mubr.bf16.mxu0 0
        %643 = vmatmul.mubr.bf16.gmra.mrb[0].mxu0 %v558
        %v644 = vpop.f32.mrb[0].mxu0
        %v645 = vadd.f32 %v550, %v644
        %v646 = vpop.f32.mrb[0].mxu0
        %v647 = vpop.f32.mrb[0].mxu0
        %v648 = vadd.f32 %v550, %v647
        %v649 = vpop.f32.mrb[0].mxu0
        %650 = vmatprep.mubr.bf16.mxu0 0
        %651 = vmatmul.mubr.bf16.gmra.mrb[0].mxu0 %v559
        %v652 = vpop.f32.mrb[0].mxu0
        %v653 = vadd.f32 %v550, %v652
        %v654 = vpop.f32.mrb[0].mxu0
        %v655 = vpop.f32.mrb[0].mxu0
        %v656 = vpop.f32.mrb[0].mxu0
        %657 = vdwg.mxu0
        %v658 = vmax.f32 %v645, 0.0
        %v659 = vmax.f32 %v648, 0.0
        %v660 = vmax.f32 %v653, 0.0
        %v661 = vld [vmem:[#allocation3] sm:$0xff]
        %v662 = vld [vmem:[#allocation3 + $0x8] sm:$0xff]
        %v663 = vld [vmem:[#allocation3 + $0x10] sm:$0xff]
        %v664 = vpack.c.bf16 %v659, %v658
        %v665 = vpack.c.bf16 %v660, %v660
        %v666 = vld [vmem:[%s393] sm:$0xf]
        %v667 = vld [vmem:[%s393 + $0x4] sm:$0xf]
        %v668 = vld [vmem:[%s393 + $0x8] sm:$0xf]
        %v669 = vld [vmem:[%s393 + $0xc] sm:$0xf]
        %v670 = vld [vmem:[%s393 + $0x10] sm:$0xf]
        %v671 = vld [vmem:[%s393 + $0x14] sm:$0xf]
        %v672 = vld [vmem:[%s393 + $0x18] sm:$0xf]
        %v673 = vld [vmem:[%s393 + $0x1c] sm:$0xf]
        %v674 = vld [vmem:[%s393 + $0x20] sm:$0xf]
        %v675 = vld [vmem:[%s393 + $0x24] sm:$0xf]
        %v676 = vld [vmem:[%s393 + $0x28] sm:$0xf]
        %v677 = vld [vmem:[%s393 + $0x2c] sm:$0xf]
        %v678 = vld [vmem:[%s393 + $0x30] sm:$0xf]
        %v679 = vld [vmem:[%s393 + $0x34] sm:$0xf]
        %v680 = vld [vmem:[%s393 + $0x38] sm:$0xf]
        %v681 = vld [vmem:[%s393 + $0x3c] sm:$0xf]
        %v698 = vunpack.c.l.b16 %v666
        %v699 = vunpack.c.l.b16 %v667
        %v700 = vunpack.c.l.b16 %v668
        %v701 = vunpack.c.l.b16 %v669
        %v702 = vunpack.c.l.b16 %v670
        %v703 = vunpack.c.l.b16 %v671
        %v704 = vunpack.c.l.b16 %v672
        %v705 = vunpack.c.l.b16 %v673
        %v706 = vunpack.c.l.b16 %v674
        %v707 = vunpack.c.l.b16 %v675
        %v708 = vunpack.c.l.b16 %v676
        %v709 = vunpack.c.l.b16 %v677
        %v710 = vunpack.c.l.b16 %v678
        %v711 = vunpack.c.l.b16 %v679
        %v712 = vunpack.c.l.b16 %v680
        %v713 = vunpack.c.l.b16 %v681
        %v714 = vpack.c.b16 %v699, %v698
        %v715 = vpack.c.b16 %v701, %v700
        %v716 = vpack.c.b16 %v703, %v702
        %v717 = vpack.c.b16 %v705, %v704
        %v718 = vpack.c.b16 %v707, %v706
        %v719 = vpack.c.b16 %v709, %v708
        %v720 = vpack.c.b16 %v711, %v710
        %v721 = vpack.c.b16 %v713, %v712
        %730 = vmatprep.subr.bf16.mxu0 0
        %731 = vmatpush1.bf16.msra.mxu0 %v714
        %732 = vmatprep.subr.bf16.mxu0 0
        %733 = vmatpush1.bf16.msra.mxu0 %v715
        %734 = vmatprep.subr.bf16.mxu0 0
        %735 = vmatpush1.bf16.msra.mxu0 %v716
        %736 = vmatprep.subr.bf16.mxu0 0
        %737 = vmatpush1.bf16.msra.mxu0 %v717
        %738 = vmatprep.subr.bf16.mxu0 0
        %739 = vmatpush1.bf16.msra.mxu0 %v718
        %740 = vmatprep.subr.bf16.mxu0 0
        %741 = vmatpush1.bf16.msra.mxu0 %v719
        %742 = vmatprep.subr.bf16.mxu0 0
        %743 = vmatpush1.bf16.msra.mxu0 %v720
        %744 = vmatprep.subr.bf16.mxu0 0
        %745 = vmatpush1.bf16.msra.mxu0 %v721
        %746 = vmatprep.subr.bf16.mxu0 0
        %747 = vmatpush1.bf16.msra.mxu0 0
        %748 = vmatprep.subr.bf16.mxu0 0
        %749 = vmatpush1.bf16.msra.mxu0 0
        %750 = vmatprep.subr.bf16.mxu0 0
        %751 = vmatpush1.bf16.msra.mxu0 0
        %752 = vmatprep.subr.bf16.mxu0 0
        %753 = vmatpush1.bf16.msra.mxu0 0
        %754 = vmatprep.subr.bf16.mxu0 0
        %755 = vmatpush1.bf16.msra.mxu0 0
        %756 = vmatprep.subr.bf16.mxu0 0
        %757 = vmatpush1.bf16.msra.mxu0 0
        %758 = vmatprep.subr.bf16.mxu0 0
        %759 = vmatpush1.bf16.msra.mxu0 0
        %760 = vmatprep.subr.bf16.mxu0 0
        %761 = vmatpush1.bf16.msra.mxu0 0
        %762 = vmatprep.mubr.bf16.mxu0 0
        %763 = vmatmul.mubr.bf16.gmra.mrb[0].mxu0 %v664
        %v764 = vpop.f32.mrb[0].mxu0
        %v765 = vadd.f32 0.0, %v764
        %v766 = vpop.f32.mrb[0].mxu0
        %v767 = vpop.f32.mrb[0].mxu0
        %v768 = vadd.f32 0.0, %v767
        %v769 = vpop.f32.mrb[0].mxu0
        %770 = vmatprep.mubr.bf16.mxu0 0
        %771 = vmatmul.mubr.bf16.gmra.mrb[0].mxu0 %v665
        %v772 = vpop.f32.mrb[0].mxu0
        %v773 = vadd.f32 0.0, %v772
        %v774 = vpop.f32.mrb[0].mxu0
        %v775 = vpop.f32.mrb[0].mxu0
        %v776 = vpop.f32.mrb[0].mxu0
        %777 = vdwg.mxu0
        %v778 = vadd.f32 %v661, %v765
        %v779 = vadd.f32 %v662, %v768
        %v780 = vadd.f32 %v663, %v773
        %781 = vst [vmem:[#allocation3] sm:$0xff] %v778
        %782 = vst [vmem:[#allocation3 + $0x8] sm:$0xff] %v779
        %783 = vst [vmem:[#allocation3 + $0x10] sm:$0xff] %v780
        %p784 = scmp.eq.s32.totalorder %s32, 2
        // Predicated region
        $region81: #{tpu_custom_call.1} parent=47 // pred_check
          %p785 = pneg %p784
        $region82: #{tpu_custom_call.1} parent=47 // pred_check_branch
          %787 = sbr.rel (%p785) target = $region84
        $region83: #{tpu_custom_call.1} parent=47 // pred_region
          %v788 = vld [vmem:[#allocation3] sm:$0xff]
          %v789 = vld [vmem:[#allocation3 + $0x8] sm:$0xff]
          %v790 = vld [vmem:[#allocation3 + $0x10] sm:$0xff]
          %791 = vst [vmem:[#allocation16] sm:$0xff] %v788
          %792 = vst [vmem:[#allocation16 + $0x8] sm:$0xff] %v789
          %793 = vst [vmem:[#allocation16 + $0x10] sm:$0xff] %v790
        $region84: #{tpu_custom_call.1} parent=47 // pred_fallthru
          _
        // Predicated region
        $region85: #{tpu_custom_call.1} parent=47 // pred_check
          %p794 = pneg %p224
        $region86: #{tpu_custom_call.1} parent=47 // pred_check_branch
          %796 = sbr.rel (%p794) target = $region88
        $region87: #{tpu_custom_call.1} parent=47 // pred_region
          %s797 = smul.u32 3, %s31
          %s799 = ssub.s32 384, 384
          %800 = vsyncadd [#allocation6], %s799
          %s801 = smul.addr %s797, 128
          %s802 = scalar_lea.hbm %s7, %s801
          %s803 = sshll.u32 [#allocation16], 4
          %s804 = int_to_ptr.vmem [resolvable:$true] %s803
          %809 = dma.vmem_to_hbm [thread:$0]  %s804, 384, %s802, [#allocation6], 128, 128, 8
        $region88: #{tpu_custom_call.1} parent=47 // pred_fallthru
          _
        // Predicated region
        $region89: #{tpu_custom_call.1} parent=47 // pred_check
          %p810 = pneg %p224
        $region90: #{tpu_custom_call.1} parent=47 // pred_check_branch
          %812 = sbr.rel (%p810) target = $region92
        $region91: #{tpu_custom_call.1} parent=47 // pred_region
          %813 = dma.done [#allocation6], 384
        $region92: #{tpu_custom_call.1} parent=47 // pred_fallthru
          _
      $region48: #{tpu_custom_call.1} parent=5 // pred_fallthru
        _
      %p814 = scmp.le.s32.totalorder 2, %s22
      // Predicated region
      $region93: #{tpu_custom_call.1} parent=5 // pred_check
        %p815 = pneg %p814
      $region94: #{tpu_custom_call.1} parent=5 // pred_check_branch
        %817 = sbr.rel (%p815) target = $region96
      $region95: #{tpu_custom_call.1} parent=5 // pred_region
        %s818 = ssub.s32 %s22, 2
      $region96: #{tpu_custom_call.1} parent=5 // pred_fallthru
        _
    $region6: #{tpu_custom_call.1} parent=1 // loop_footer
      %s26 = sadd.s32 1, %s22
    $region7: #{tpu_custom_call.1} parent=1 // loop_footer_branch
      %21 = sbr.rel target = $region3
    $region8: #{tpu_custom_call.1} parent=1 // loop_exit
      _
    %819 = vsyncpa [#allocation5], 1
    %s820 = scalar_lea.sflag [#allocation5], 1
    %821 = vsyncpa %s820, 1
    %822 = vsyncpa [#allocation8], 1
    %823 = vsyncpa [#allocation11], 1
    %s824 = scalar_lea.sflag [#allocation11], 1
    %825 = vsyncpa %s824, 1
    %826 = vsyncpa [#allocation14], 1
    %s827 = scalar_lea.sflag [#allocation14], 1
    %828 = vsyncpa %s827, 1
    %829 = vsyncpa [#allocation6], 1
    %s830 = scalar_lea.sflag [#allocation6], 1
    %831 = vsyncpa %s830, 1

</llo_original>
